<compile_context>
chip_gen: v7x
topology: tpu7x:2x2x1
jax: 0.10.0
libtpu: 0.0.40
codegen_flags: <defaults>
</compile_context>

<pallas_src>
import jax
import jax.numpy as jnp
from jax.experimental import pallas as pl
from jax.experimental.pallas import tpu as pltpu


def _round_up(x: int, m: int) -> int:
    return ((x + m - 1) // m) * m


def _force_kernel(posT_ref, w1t_ref, bT_ref, w2T_ref, pfT_ref):
    """partial_forces^T = dE/dpos^T for E = sum_i w2 . tanh(pos_i @ W1 + b).

    Lane-dense layout: atoms on the 128-lane axis.
      posT  : [3, TILE]   (resident per-step tile)
      w1t   : [H, 3]      (W1^T, resident)
      bT    : [H, 1]
      w2T   : [H, 1]
      pfT   : [3, TILE]   (output tile)
    """
    posT = posT_ref[...]                     # [3, TILE] f32
    w1t = w1t_ref[...]                       # [H, 3]    f32
    bT = bT_ref[...]                         # [H, 1]    f32
    w2T = w2T_ref[...]                       # [H, 1]    f32

    # Forward recompute: z[h, n] = sum_k W1[k, h] * pos[n, k] + b[h]
    # K=3 contraction as three VPU FMAs (no MXU; K would be padded to 128+).
    z = (w1t[:, 0:1] * posT[0:1, :]
         + w1t[:, 1:2] * posT[1:2, :]
         + w1t[:, 2:3] * posT[2:3, :]
         + bT)                                # [H, TILE]
    t = jnp.tanh(z)                           # [H, TILE]  (EUP)

    # dE/dz = w2 * (1 - t^2), folded to avoid an extra full-tile VPU pass.
    dz = w2T - (w2T * t) * t                  # [H, TILE]

    # dE/dpos[n, k] = sum_h W1[k, h] * dz[h, n]; signs of the reference
    # module's grad(-E) followed by .negative() cancel exactly.
    pfT_ref[0:1, :] = jnp.sum(w1t[:, 0:1] * dz, axis=0, keepdims=True)
    pfT_ref[1:2, :] = jnp.sum(w1t[:, 1:2] * dz, axis=0, keepdims=True)
    pfT_ref[2:3, :] = jnp.sum(w1t[:, 2:3] * dz, axis=0, keepdims=True)


def _energy_fn(pos, w1, b, w2):
    """Upstream synthetic energy model (plain JAX glue). Returns [1, 1]."""
    z = pos @ w1 + b                          # [N, H]
    per_atom = jnp.tanh(z) * w2               # [N, H]
    return jnp.sum(per_atom).reshape(1, 1)    # [1, 1]


def calculate_force(data, params, *, tile_atoms: int = 8192):
    """Pallas analogue of CalculateForce.forward.

    data: dict with 'pos' [N,3] f32 and 'total_energy' [1,1] f32 (computed
          from pos with `params` via _energy_fn, mirroring the torch graph).
    Returns the same dict with 'partial_forces' [N,3] f32 added.
    """
    pos = data["pos"]
    w1, b, w2 = params["w1"], params["b"], params["w2"]
    n = pos.shape[0]
    h = w1.shape[1]

    # Atom tile: lane-dense (multiple of 128), capped so [H, TILE] f32
    # intermediates + double-buffered pos/pf tiles fit v7x's smaller VMEM
    # with headroom (H=32, TILE=8192 -> ~1 MiB per intermediate).
    tile = min(tile_atoms, _round_up(n, 128))
    n_pad = _round_up(n, tile)
    grid = (n_pad // tile,)

    # Lane-dense transposed inputs; padding atoms produce garbage forces that
    # are sliced off below.  W1^T precomputed here (free, tiny, done once).
    posT = jnp.zeros((3, n_pad), jnp.float32).at[:, :n].set(pos.T)
    w1t = w1.T.astype(jnp.float32)            # [H, 3]
    bT = b.T.astype(jnp.float32)              # [H, 1]
    w2T = w2.T.astype(jnp.float32)            # [H, 1]

    pfT = pl.pallas_call(
        _force_kernel,
        out_shape=jax.ShapeDtypeStruct((3, n_pad), jnp.float32),
        grid_spec=pltpu.PrefetchScalarGridSpec(
            num_scalar_prefetch=0,
            grid=grid,
            in_specs=[
                pl.BlockSpec((3, tile), lambda i: (0, i)),   # posT tile
                pl.BlockSpec((h, 3), lambda i: (0, 0)),      # W1^T resident
                pl.BlockSpec((h, 1), lambda i: (0, 0)),      # b^T  resident
                pl.BlockSpec((h, 1), lambda i: (0, 0)),      # w2^T resident
            ],
            out_specs=pl.BlockSpec((3, tile), lambda i: (0, i)),
        ),
        compiler_params=pltpu.CompilerParams(
            dimension_semantics=("parallel",),
        ),
        cost_estimate=pl.CostEstimate(
            flops=10 * n * h,
            transcendentals=n * h,
            bytes_accessed=24 * n,
        ),
    )(posT, w1t, bT, w2T)

    partial_forces = pfT[:, :n].T             # back to [N, 3]

    out = dict(data)
    out["partial_forces"] = partial_forces
    return out


if __name__ == "__main__":
    N_ATOMS = 8     # number of atoms
    HIDDEN = 32     # hidden width of the synthetic energy model

    key = jax.random.PRNGKey(0)
    k_pos, k_w1, k_b, k_w2 = jax.random.split(key, 4)

    pos = jax.random.normal(k_pos, (N_ATOMS, 3), dtype=jnp.float32)

    # Deterministic synthetic "upstream model" parameters.
    params = {
        "w1": 0.5 * jax.random.normal(k_w1, (3, HIDDEN), dtype=jnp.float32),
        "b": 0.1 * jax.random.normal(k_b, (1, HIDDEN), dtype=jnp.float32),
        "w2": 0.5 * jax.random.normal(k_w2, (1, HIDDEN), dtype=jnp.float32),
    }

    # Upstream of this module: total_energy computed from pos.
    # TODO(synk): the real module differentiates an arbitrary upstream graph;
    # here the energy model is fixed to _energy_fn and its backward is coded
    # analytically in the kernel.
    total_energy = _energy_fn(pos, params["w1"], params["b"], params["w2"])
    data = {"pos": pos, "total_energy": total_energy}

    out = calculate_force(data, params)
    pf = jax.block_until_ready(out["partial_forces"])

    # Cross-check the Pallas backward pass against JAX autodiff of the same
    # energy model (the semantic reference for torch.autograd.grad + negative).
    ref = jax.grad(
        lambda p: jnp.sum(_energy_fn(p, params["w1"], params["b"], params["w2"]))
    )(pos)
    ref = jax.block_until_ready(ref)

    assert pf.shape == (N_ATOMS, 3) and pf.dtype == jnp.float32
    assert jnp.allclose(pf, ref, atol=1e-5, rtol=1e-5), "mismatch vs jax.grad reference"

    print("KERNEL_OK")
</pallas_src>

<mosaic_0001>
module attributes {stable_mosaic.version = 11 : i64} {
  func.func @_force_kernel(%arg0: i32, %arg1: memref<3x128xf32, #tpu.memory_space<vmem>>, %arg2: memref<32x3xf32, #tpu.memory_space<vmem>>, %arg3: memref<32x1xf32, #tpu.memory_space<vmem>>, %arg4: memref<32x1xf32, #tpu.memory_space<vmem>>, %arg5: memref<3x128xf32, #tpu.memory_space<vmem>>) attributes {dimension_semantics = [#tpu.dimension_semantics<parallel>], iteration_bounds = array<i64: 1>, scalar_prefetch = 0 : i64, scratch_operands = 0 : i64, tpu.core_type = #tpu.core_type<tc>, window_params = [{transform_indices = @transform_0, window_bounds = array<i64: 3, 128>}, {pipeline_mode = #tpu.pipeline_mode<synchronous>, transform_indices = @transform_1, window_bounds = array<i64: 32, 3>}, {pipeline_mode = #tpu.pipeline_mode<synchronous>, transform_indices = @transform_2, window_bounds = array<i64: 32, 1>}, {pipeline_mode = #tpu.pipeline_mode<synchronous>, transform_indices = @transform_3, window_bounds = array<i64: 32, 1>}, {transform_indices = @transform_4, window_bounds = array<i64: 3, 128>}]} {
    %c0 = arith.constant 0 : index
    %c0_0 = arith.constant 0 : index
    %0 = vector.load %arg1[%c0, %c0_0] : memref<3x128xf32, #tpu.memory_space<vmem>>, vector<3x128xf32>
    %c0_1 = arith.constant 0 : index
    %c0_2 = arith.constant 0 : index
    %1 = vector.load %arg2[%c0_1, %c0_2] : memref<32x3xf32, #tpu.memory_space<vmem>>, vector<32x3xf32>
    %c0_3 = arith.constant 0 : index
    %c0_4 = arith.constant 0 : index
    %2 = vector.load %arg3[%c0_3, %c0_4] : memref<32x1xf32, #tpu.memory_space<vmem>>, vector<32x1xf32>
    %c0_5 = arith.constant 0 : index
    %c0_6 = arith.constant 0 : index
    %3 = vector.load %arg4[%c0_5, %c0_6] : memref<32x1xf32, #tpu.memory_space<vmem>>, vector<32x1xf32>
    %4 = vector.extract_strided_slice %1 {offsets = [0, 0], sizes = [32, 1], strides = [1, 1]} : vector<32x3xf32> to vector<32x1xf32>
    %5 = vector.extract_strided_slice %0 {offsets = [0, 0], sizes = [1, 128], strides = [1, 1]} : vector<3x128xf32> to vector<1x128xf32>
    %6 = vector.broadcast %4 : vector<32x1xf32> to vector<32x128xf32>
    %7 = vector.broadcast %5 : vector<1x128xf32> to vector<32x128xf32>
    %8 = arith.mulf %6, %7 : vector<32x128xf32>
    %9 = vector.extract_strided_slice %1 {offsets = [0, 1], sizes = [32, 1], strides = [1, 1]} : vector<32x3xf32> to vector<32x1xf32>
    %10 = vector.extract_strided_slice %0 {offsets = [1, 0], sizes = [1, 128], strides = [1, 1]} : vector<3x128xf32> to vector<1x128xf32>
    %11 = vector.broadcast %9 : vector<32x1xf32> to vector<32x128xf32>
    %12 = vector.broadcast %10 : vector<1x128xf32> to vector<32x128xf32>
    %13 = arith.mulf %11, %12 : vector<32x128xf32>
    %14 = arith.addf %8, %13 : vector<32x128xf32>
    %15 = vector.extract_strided_slice %1 {offsets = [0, 2], sizes = [32, 1], strides = [1, 1]} : vector<32x3xf32> to vector<32x1xf32>
    %16 = vector.extract_strided_slice %0 {offsets = [2, 0], sizes = [1, 128], strides = [1, 1]} : vector<3x128xf32> to vector<1x128xf32>
    %17 = vector.broadcast %15 : vector<32x1xf32> to vector<32x128xf32>
    %18 = vector.broadcast %16 : vector<1x128xf32> to vector<32x128xf32>
    %19 = arith.mulf %17, %18 : vector<32x128xf32>
    %20 = arith.addf %14, %19 : vector<32x128xf32>
    %21 = vector.broadcast %2 : vector<32x1xf32> to vector<32x128xf32>
    %22 = arith.addf %20, %21 : vector<32x128xf32>
    %23 = math.tanh %22 : vector<32x128xf32>
    %24 = vector.broadcast %3 : vector<32x1xf32> to vector<32x128xf32>
    %25 = arith.mulf %24, %23 : vector<32x128xf32>
    %26 = arith.mulf %25, %23 : vector<32x128xf32>
    %27 = vector.broadcast %3 : vector<32x1xf32> to vector<32x128xf32>
    %28 = arith.subf %27, %26 : vector<32x128xf32>
    %29 = vector.extract_strided_slice %1 {offsets = [0, 0], sizes = [32, 1], strides = [1, 1]} : vector<32x3xf32> to vector<32x1xf32>
    %30 = vector.broadcast %29 : vector<32x1xf32> to vector<32x128xf32>
    %31 = arith.mulf %30, %28 : vector<32x128xf32>
    %cst = arith.constant dense<0.000000e+00> : vector<128xf32>
    %32 = vector.multi_reduction <add>, %31, %cst [0] : vector<32x128xf32> to vector<128xf32>
    %33 = vector.shape_cast %32 : vector<128xf32> to vector<1x128xf32>
    %c0_7 = arith.constant 0 : index
    %c0_8 = arith.constant 0 : index
    %34 = vector.load %arg5[%c0_7, %c0_8] : memref<3x128xf32, #tpu.memory_space<vmem>>, vector<1x128xf32>
    tpu.vector_store %arg5[%c0_7, %c0_8], %33 {strides = array<i32>} : memref<3x128xf32, #tpu.memory_space<vmem>>, vector<1x128xf32>,
    %35 = vector.extract_strided_slice %1 {offsets = [0, 1], sizes = [32, 1], strides = [1, 1]} : vector<32x3xf32> to vector<32x1xf32>
    %36 = vector.broadcast %35 : vector<32x1xf32> to vector<32x128xf32>
    %37 = arith.mulf %36, %28 : vector<32x128xf32>
    %cst_9 = arith.constant dense<0.000000e+00> : vector<128xf32>
    %38 = vector.multi_reduction <add>, %37, %cst_9 [0] : vector<32x128xf32> to vector<128xf32>
    %39 = vector.shape_cast %38 : vector<128xf32> to vector<1x128xf32>
    %c1 = arith.constant 1 : index
    %c0_10 = arith.constant 0 : index
    %40 = vector.load %arg5[%c1, %c0_10] : memref<3x128xf32, #tpu.memory_space<vmem>>, vector<1x128xf32>
    tpu.vector_store %arg5[%c1, %c0_10], %39 {strides = array<i32>} : memref<3x128xf32, #tpu.memory_space<vmem>>, vector<1x128xf32>,
    %41 = vector.extract_strided_slice %1 {offsets = [0, 2], sizes = [32, 1], strides = [1, 1]} : vector<32x3xf32> to vector<32x1xf32>
    %42 = vector.broadcast %41 : vector<32x1xf32> to vector<32x128xf32>
    %43 = arith.mulf %42, %28 : vector<32x128xf32>
    %cst_11 = arith.constant dense<0.000000e+00> : vector<128xf32>
    %44 = vector.multi_reduction <add>, %43, %cst_11 [0] : vector<32x128xf32> to vector<128xf32>
    %45 = vector.shape_cast %44 : vector<128xf32> to vector<1x128xf32>
    %c2 = arith.constant 2 : index
    %c0_12 = arith.constant 0 : index
    %46 = vector.load %arg5[%c2, %c0_12] : memref<3x128xf32, #tpu.memory_space<vmem>>, vector<1x128xf32>
    tpu.vector_store %arg5[%c2, %c0_12], %45 {strides = array<i32>} : memref<3x128xf32, #tpu.memory_space<vmem>>, vector<1x128xf32>,
    return
  }
  func.func @transform_0(%arg0: i32) -> (i32, i32) {
    %c0_i32 = arith.constant 0 : i32
    %c0_i32_0 = arith.constant 0 : i32
    return %c0_i32, %arg0 : i32, i32
  }
  func.func @transform_1(%arg0: i32) -> (i32, i32) {
    %c0_i32 = arith.constant 0 : i32
    %c0_i32_0 = arith.constant 0 : i32
    %c0_i32_1 = arith.constant 0 : i32
    return %c0_i32, %c0_i32_0 : i32, i32
  }
  func.func @transform_2(%arg0: i32) -> (i32, i32) {
    %c0_i32 = arith.constant 0 : i32
    %c0_i32_0 = arith.constant 0 : i32
    %c0_i32_1 = arith.constant 0 : i32
    return %c0_i32, %c0_i32_0 : i32, i32
  }
  func.func @transform_3(%arg0: i32) -> (i32, i32) {
    %c0_i32 = arith.constant 0 : i32
    %c0_i32_0 = arith.constant 0 : i32
    %c0_i32_1 = arith.constant 0 : i32
    return %c0_i32, %c0_i32_0 : i32, i32
  }
  func.func @transform_4(%arg0: i32) -> (i32, i32) {
    %c0_i32 = arith.constant 0 : i32
    %c0_i32_0 = arith.constant 0 : i32
    return %c0_i32, %arg0 : i32, i32
  }
}

</mosaic_0001>

<llo_original>
// kernel: tpu_custom_call.1
$region0: #{tpu_custom_call.1}
  #allocation0 [shape = 'u32[]', space=smem, size = 0x4, offset = 0x4, fixed_abs, tag = 'smem constant byte address 0x4 - core index']
  #allocation1 [shape = 'u32[144,128]{1,0:T(1,128)}', space=vmem, size = 0x12000, scoped, tag = 'internal scratch']
  %s0 = inlined_call_operand.vmem [shape: f32[3,128], index: 0, kind: input, shape index: {}]
  %s1 = inlined_call_operand.vmem [shape: f32[32,3], index: 1, kind: input, shape index: {}]
  %s2 = inlined_call_operand.vmem [shape: f32[32,1], index: 2, kind: input, shape index: {}]
  %s3 = inlined_call_operand.vmem [shape: f32[32,1], index: 3, kind: input, shape index: {}]
  %s4 = inlined_call_operand.hbm [shape: f32[3,128], index: 4, kind: output, shape index: {}]
  %s5 = sld [smem:[#allocation0]]
  $region26: #{tpu_custom_call.1} parent=0
    _
  %s7 = ssub.s32 1, %s5
  %s8 = scalar_select 0, %s7, %s5
  $region1: #{tpu_custom_call.1} parent=0
    #allocation2 [shape = 'u8[2048]{0}', space=vmem, size = 0x800, scoped, tag = 'output window, operand 0, single buffered']
    #allocation3 [shape = 's32[1]{0}', space=sflag, size = 0x4, scoped, tag = 'scoped memory for tpu_custom_call.1']
    %9 = vsyncpa [#allocation3], 0
    // Predicated region
    $region2: #{tpu_custom_call.1} parent=1 // pred_check
      _
    $region3: #{tpu_custom_call.1} parent=1 // pred_check_branch
      %11 = sbr.rel (0) target = $region5
    $region4: #{tpu_custom_call.1} parent=1 // pred_region
      _
    $region5: #{tpu_custom_call.1} parent=1 // pred_fallthru
      _
    // Predicated region
    $region6: #{tpu_custom_call.1} parent=1 // pred_check
      _
    $region7: #{tpu_custom_call.1} parent=1 // pred_check_branch
      %13 = sbr.rel (0) target = $region9
    $region8: #{tpu_custom_call.1} parent=1 // pred_region
      _
    $region9: #{tpu_custom_call.1} parent=1 // pred_fallthru
      _
    // Predicated region
    $region10: #{tpu_custom_call.1} parent=1 // pred_check
      _
    $region11: #{tpu_custom_call.1} parent=1 // pred_check_branch
      %15 = sbr.rel (0) target = $region13
    $region12: #{tpu_custom_call.1} parent=1 // pred_region
      _
    $region13: #{tpu_custom_call.1} parent=1 // pred_fallthru
      _
    // Predicated region
    $region14: #{tpu_custom_call.1} parent=1 // pred_check
      _
    $region15: #{tpu_custom_call.1} parent=1 // pred_check_branch
      %17 = sbr.rel (0) target = $region17
    $region16: #{tpu_custom_call.1} parent=1 // pred_region
      _
    $region17: #{tpu_custom_call.1} parent=1 // pred_fallthru
      _
    %v18 = vld [vmem:[%s0] sm:$0x7]
    %v19 = vld [vmem:[%s1] sm:$0xff]
    %v20 = vld [vmem:[%s1 + $0x8] sm:$0xff]
    %v21 = vld [vmem:[%s1 + $0x10] sm:$0xff]
    %v22 = vld [vmem:[%s1 + $0x18] sm:$0xff]
    %v23 = vld [vmem:[%s2] sm:$0xff]
    %v24 = vld [vmem:[%s2 + $0x8] sm:$0xff]
    %v25 = vld [vmem:[%s2 + $0x10] sm:$0xff]
    %v26 = vld [vmem:[%s2 + $0x18] sm:$0xff]
    %v27 = vld [vmem:[%s3] sm:$0xff]
    %v28 = vld [vmem:[%s3 + $0x8] sm:$0xff]
    %v29 = vld [vmem:[%s3 + $0x10] sm:$0xff]
    %v30 = vld [vmem:[%s3 + $0x18] sm:$0xff]
    %32 = vset.pattern.permute.xlu0 0
    %33 = vperm.xlu0 %32, %v19
    %v34 = vpop.permute.xlu0 %33
    %37 = vset.pattern.permute.xlu0 0
    %38 = vperm.xlu0 %37, %v20
    %v39 = vpop.permute.xlu0 %38
    %42 = vset.pattern.permute.xlu0 0
    %43 = vperm.xlu0 %42, %v21
    %v44 = vpop.permute.xlu0 %43
    %47 = vset.pattern.permute.xlu0 0
    %48 = vperm.xlu0 %47, %v22
    %v49 = vpop.permute.xlu0 %48
    %v51 = vlaneseq
    %v52 = vshrl.u32 %v51, 7
    %v53 = vsub.s32 0, %v52
    %v54 = vrot.slane %v18, %v53
    %v55 = vmul.f32 %v34, %v54
    %v56 = vmul.f32 %v39, %v54
    %v57 = vmul.f32 %v44, %v54
    %v58 = vmul.f32 %v49, %v54
    %59 = vset.pattern.permute.xlu0 1
    %60 = vperm.xlu0 %59, %v19
    %v61 = vpop.permute.xlu0 %60
    %63 = vset.pattern.permute.xlu0 1
    %64 = vperm.xlu0 %63, %v20
    %v65 = vpop.permute.xlu0 %64
    %67 = vset.pattern.permute.xlu0 1
    %68 = vperm.xlu0 %67, %v21
    %v69 = vpop.permute.xlu0 %68
    %71 = vset.pattern.permute.xlu0 1
    %72 = vperm.xlu0 %71, %v22
    %v73 = vpop.permute.xlu0 %72
    %v75 = vlaneseq
    %v76 = vshrl.u32 %v75, 7
    %v77 = vsub.s32 1, %v76
    %v78 = vrot.slane %v18, %v77
    %v79 = vmul.f32 %v61, %v78
    %v80 = vmul.f32 %v65, %v78
    %v81 = vmul.f32 %v69, %v78
    %v82 = vmul.f32 %v73, %v78
    %v83 = vadd.f32 %v55, %v79
    %v84 = vadd.f32 %v56, %v80
    %v85 = vadd.f32 %v57, %v81
    %v86 = vadd.f32 %v58, %v82
    %87 = vset.pattern.permute.xlu0 2
    %88 = vperm.xlu0 %87, %v19
    %v89 = vpop.permute.xlu0 %88
    %91 = vset.pattern.permute.xlu0 2
    %92 = vperm.xlu0 %91, %v20
    %v93 = vpop.permute.xlu0 %92
    %95 = vset.pattern.permute.xlu0 2
    %96 = vperm.xlu0 %95, %v21
    %v97 = vpop.permute.xlu0 %96
    %99 = vset.pattern.permute.xlu0 2
    %100 = vperm.xlu0 %99, %v22
    %v101 = vpop.permute.xlu0 %100
    %v103 = vlaneseq
    %v104 = vshrl.u32 %v103, 7
    %v105 = vsub.s32 2, %v104
    %v106 = vrot.slane %v18, %v105
    %v107 = vmul.f32 %v89, %v106
    %v108 = vmul.f32 %v93, %v106
    %v109 = vmul.f32 %v97, %v106
    %v110 = vmul.f32 %v101, %v106
    %v111 = vadd.f32 %v83, %v107
    %v112 = vadd.f32 %v84, %v108
    %v113 = vadd.f32 %v85, %v109
    %v114 = vadd.f32 %v86, %v110
    %116 = vset.pattern.permute.xlu0 0
    %117 = vperm.xlu0 %116, %v23
    %v118 = vpop.permute.xlu0 %117
    %121 = vset.pattern.permute.xlu0 0
    %122 = vperm.xlu0 %121, %v24
    %v123 = vpop.permute.xlu0 %122
    %126 = vset.pattern.permute.xlu0 0
    %127 = vperm.xlu0 %126, %v25
    %v128 = vpop.permute.xlu0 %127
    %131 = vset.pattern.permute.xlu0 0
    %132 = vperm.xlu0 %131, %v26
    %v133 = vpop.permute.xlu0 %132
    %v135 = vadd.f32 %v111, %v118
    %v136 = vadd.f32 %v112, %v123
    %v137 = vadd.f32 %v113, %v128
    %v138 = vadd.f32 %v114, %v133
    %v139 = vtanh.pop %v135
    %v140 = vtanh.pop %v136
    %v141 = vtanh.pop %v137
    %v142 = vtanh.pop %v138
    %144 = vset.pattern.permute.xlu0 0
    %145 = vperm.xlu0 %144, %v27
    %v146 = vpop.permute.xlu0 %145
    %149 = vset.pattern.permute.xlu0 0
    %150 = vperm.xlu0 %149, %v28
    %v151 = vpop.permute.xlu0 %150
    %154 = vset.pattern.permute.xlu0 0
    %155 = vperm.xlu0 %154, %v29
    %v156 = vpop.permute.xlu0 %155
    %159 = vset.pattern.permute.xlu0 0
    %160 = vperm.xlu0 %159, %v30
    %v161 = vpop.permute.xlu0 %160
    %v163 = vmul.f32 %v146, %v139
    %v164 = vmul.f32 %v151, %v140
    %v165 = vmul.f32 %v156, %v141
    %v166 = vmul.f32 %v161, %v142
    %v167 = vmul.f32 %v163, %v139
    %v168 = vmul.f32 %v164, %v140
    %v169 = vmul.f32 %v165, %v141
    %v170 = vmul.f32 %v166, %v142
    %v171 = vsub.f32 %v146, %v167
    %v172 = vsub.f32 %v151, %v168
    %v173 = vsub.f32 %v156, %v169
    %v174 = vsub.f32 %v161, %v170
    %v175 = vmul.f32 %v34, %v171
    %v176 = vmul.f32 %v39, %v172
    %v177 = vmul.f32 %v44, %v173
    %v178 = vmul.f32 %v49, %v174
    %v179 = vadd.f32 %v175, %v176
    %v180 = vadd.f32 %v179, %v177
    %v181 = vadd.f32 %v180, %v178
    %v182 = vrot.slane %v181, 4
    %v183 = vadd.f32 %v181, %v182
    %v184 = vrot.slane %v183, 2
    %v185 = vadd.f32 %v183, %v184
    %v186 = vrot.slane %v185, 1
    %v187 = vadd.f32 %v185, %v186
    %188 = vst [vmem:[#allocation2] sm:$0x1] %v187
    %v189 = vmul.f32 %v61, %v171
    %v190 = vmul.f32 %v65, %v172
    %v191 = vmul.f32 %v69, %v173
    %v192 = vmul.f32 %v73, %v174
    %v193 = vadd.f32 %v189, %v190
    %v194 = vadd.f32 %v193, %v191
    %v195 = vadd.f32 %v194, %v192
    %v196 = vrot.slane %v195, 4
    %v197 = vadd.f32 %v195, %v196
    %v198 = vrot.slane %v197, 2
    %v199 = vadd.f32 %v197, %v198
    %v200 = vrot.slane %v199, 1
    %v201 = vadd.f32 %v199, %v200
    %202 = vst [vmem:[#allocation2 + $0x1] sm:$0x1] %v201
    %v203 = vmul.f32 %v89, %v171
    %v204 = vmul.f32 %v93, %v172
    %v205 = vmul.f32 %v97, %v173
    %v206 = vmul.f32 %v101, %v174
    %v207 = vadd.f32 %v203, %v204
    %v208 = vadd.f32 %v207, %v205
    %v209 = vadd.f32 %v208, %v206
    %v210 = vrot.slane %v209, 4
    %v211 = vadd.f32 %v209, %v210
    %v212 = vrot.slane %v211, 2
    %v213 = vadd.f32 %v211, %v212
    %v214 = vrot.slane %v213, 1
    %v215 = vadd.f32 %v213, %v214
    %216 = vst [vmem:[#allocation2 + $0x2] sm:$0x1] %v215
    // Predicated region
    $region18: #{tpu_custom_call.1} parent=1 // pred_check
      _
    $region19: #{tpu_custom_call.1} parent=1 // pred_check_branch
      %218 = sbr.rel (0) target = $region21
    $region20: #{tpu_custom_call.1} parent=1 // pred_region
      %s220 = ssub.s32 64, 64
      %221 = vsyncadd [#allocation3], %s220
      %s223 = sshll.u32 [#allocation2], 4
      %s224 = int_to_ptr.vmem [resolvable:$true] %s223
      %226 = dma.vmem_to_hbm [thread:$0]  %s224, 64, %s4, [#allocation3]
    $region21: #{tpu_custom_call.1} parent=1 // pred_fallthru
      _
    // Predicated region
    $region22: #{tpu_custom_call.1} parent=1 // pred_check
      _
    $region23: #{tpu_custom_call.1} parent=1 // pred_check_branch
      %228 = sbr.rel (0) target = $region25
    $region24: #{tpu_custom_call.1} parent=1 // pred_region
      %229 = dma.done [#allocation3], 64
    $region25: #{tpu_custom_call.1} parent=1 // pred_fallthru
      _
    %230 = vsyncpa [#allocation3], 1

</llo_original>
